<compile_context>
chip_gen: v7x
topology: tpu7x:2x2x1
jax: 0.10.0
libtpu: 0.0.40
codegen_flags: <defaults>
</compile_context>

<pallas_src>
import math

import jax
import jax.numpy as jnp
from jax.experimental import pallas as pl
from jax.experimental.pallas import tpu as pltpu

DEFAULT_INDEX_BITS = 10
MAX_LAYERS = 18
NEG_SLOPE = 0.2
LRELU_SCALE = math.sqrt(2.0)
LR_MUL = 0.01
MAX_BATCH_TILE = 256        # MXU-filling row tile (v6e/v7x MXU is 256 wide)


def _round_up(n, m):
    return ((n + m - 1) // m) * m


def _choose_batch_tile(batch, max_tile=MAX_BATCH_TILE):
    """Single grid step for small batches; large, even-step tiling otherwise."""
    bt = min(_round_up(batch, 8), max_tile)
    b_pad = _round_up(batch, bt)
    steps = b_pad // bt
    if steps > 1 and steps % 2 == 1:
        # Prefer an even number of grid steps so v7x's two TensorCores stay
        # balanced under dimension_semantics=("parallel",).
        for cand in range(bt, max(8, bt // 2) - 1, -8):
            bp = _round_up(batch, cand)
            if (bp // cand) % 2 == 0:
                return cand, bp
    return bt, b_pad


def _vmem_capacity_bytes():
    try:
        return int(pltpu.get_tpu_info().vmem_capacity_bytes)
    except Exception:
        return 64 * 2 ** 20     # conservative fallback: v7x per-TC VMEM


# ----------------------------- Pallas kernel --------------------------------
def _make_kernel(p_in, p_hid, p_out):
    """Kernel factory closing over the (static) padded layer dimensions."""

    def hidden_layer(h_bf16, w_bf16, bias_f32):
        # MXU matmul bf16 x bf16 with f32 accumulation, bias add in f32,
        # then fused_leaky_relu in bf16 (one cast per layer).
        y = jnp.dot(h_bf16, w_bf16, preferred_element_type=jnp.float32) + bias_f32
        y = y.astype(jnp.bfloat16)
        return jnp.where(y >= 0, y, y * NEG_SLOPE) * LRELU_SCALE

    def kernel(ab_ref, x_ref, wa_ref, wb_ref, bh_ref, bo_ref, o_ref):
        # ab_ref: (Bt, 2*p_out) f32 = [a | b];  x_ref: (Bt, p_in) bf16.
        # wa/wb are bf16 weight slabs (row-concatenated, resident in VMEM).
        h = x_ref[...]
        h = hidden_layer(h, wa_ref[0:p_in, :],                         bh_ref[0:1, :])
        h = hidden_layer(h, wa_ref[p_in:p_in + p_hid, :],              bh_ref[1:2, :])
        h = hidden_layer(h, wa_ref[p_in + p_hid:p_in + 2 * p_hid, :],  bh_ref[2:3, :])
        h = hidden_layer(h, wb_ref[0:p_hid, :],                        bo_ref[0:1, :])
        # Final layer + sigmoid + blend stay in f32 (feeds the output directly).
        y = jnp.dot(h, wb_ref[p_hid:p_hid + p_out, :],
                    preferred_element_type=jnp.float32) + bo_ref[1:2, :]
        y = jnp.where(y >= 0.0, y, NEG_SLOPE * y) * LRELU_SCALE
        s = jax.nn.sigmoid(y)                 # EUP, f32
        a = ab_ref[:, 0:p_out]                # lane-aligned static slices
        b = ab_ref[:, p_out:2 * p_out]
        o_ref[...] = a + s * (b - a)          # blend, (Bt, p_out)

    return kernel


# ------------------------------- glue ----------------------------------------
def build_mlp_inputs(a, b, layer_idx=None, rgb=None, extra=None,
                     index_bits=DEFAULT_INDEX_BITS):
    """Build the concatenated MLP input for B blend calls (matches torch forward)."""
    batch = a.shape[0]
    parts = [a, b]
    if extra is not None:
        parts.append(extra.reshape(batch, -1).astype(jnp.float32))
    if index_bits > 0:
        if layer_idx is None:
            ind = jnp.zeros((batch, MAX_LAYERS + 1), jnp.float32)
        else:
            ind = jax.nn.one_hot(layer_idx, MAX_LAYERS + 1, dtype=jnp.float32)
        if rgb is not None:
            rgb_f = jnp.asarray(rgb).astype(jnp.float32)
            ind = ind.at[:, -1].set(jnp.maximum(ind[:, -1], rgb_f))
        parts.append(jnp.tile(ind, (1, index_bits)))   # indicator.repeat(index_bits)
    return jnp.concatenate(parts, axis=-1)


def pack_params(params):
    """Pack 5 (pre-scaled, transposed) layers into 4 padded slabs.

    Weights -> bf16, zero-padded to 128-multiples and concatenated along the
    input (sublane) axis; biases -> two small f32 slabs.
    """
    (w1, b1), (w2, b2), (w3, b3), (w4, b4), (w5, b5) = params
    in_dim = w1.shape[0]
    hid = w2.shape[0]
    size = w5.shape[1]
    p_in = _round_up(in_dim, 128)
    p_hid = _round_up(hid, 128)
    p_out = _round_up(size, 128)

    wa = jnp.zeros((p_in + 2 * p_hid, p_hid), jnp.bfloat16)
    wa = wa.at[0:in_dim, 0:hid].set(w1.astype(jnp.bfloat16))
    wa = wa.at[p_in:p_in + hid, 0:hid].set(w2.astype(jnp.bfloat16))
    wa = wa.at[p_in + p_hid:p_in + p_hid + hid, 0:hid].set(w3.astype(jnp.bfloat16))

    wb = jnp.zeros((p_hid + p_out, p_out), jnp.bfloat16)
    wb = wb.at[0:hid, 0:size].set(w4.astype(jnp.bfloat16))
    wb = wb.at[p_hid:p_hid + size, 0:size].set(w5.astype(jnp.bfloat16))

    bh = jnp.zeros((3, p_hid), jnp.float32)
    bh = bh.at[0, 0:hid].set(b1).at[1, 0:hid].set(b2).at[2, 0:hid].set(b3)
    bo = jnp.zeros((2, p_out), jnp.float32)
    bo = bo.at[0, 0:size].set(b4).at[1, 0:size].set(b5)
    return wa, wb, bh, bo, (p_in, p_hid, p_out)


# ------------------------------- wrapper -------------------------------------
def latent_blender_forward(a, b, params, layer_idx=None, rgb=None, extra=None,
                           index_bits=DEFAULT_INDEX_BITS,
                           max_batch_tile=MAX_BATCH_TILE):
    """Batched forward: a, b are (B, size); one blend per row, shared weights."""
    size = a.shape[-1]
    a = a.reshape(-1, size).astype(jnp.float32)
    b = b.reshape(-1, size).astype(jnp.float32)
    batch = a.shape[0]

    x = build_mlp_inputs(a, b, layer_idx=layer_idx, rgb=rgb, extra=extra,
                         index_bits=index_bits)
    wa, wb, bh, bo, (p_in, p_hid, p_out) = pack_params(params)
    assert x.shape[-1] == params[0][0].shape[0], "MLP input width mismatch"

    bt, b_pad = _choose_batch_tile(batch, max_batch_tile)
    grid = (b_pad // bt,)

    # Streamed operand 1: f32 blend endpoints, one lane-dense slab [a | b].
    ab = jnp.zeros((b_pad, 2 * p_out), jnp.float32)
    ab = ab.at[:batch, 0:size].set(a).at[:batch, p_out:p_out + size].set(b)
    # Streamed operand 2: bf16 MLP input (half the HBM->VMEM bytes; the first
    # matmul consumes bf16 anyway).
    x_pad = jnp.zeros((b_pad, p_in), jnp.bfloat16)
    x_pad = x_pad.at[:batch, :x.shape[1]].set(x.astype(jnp.bfloat16))

    # VMEM budget: single-copy resident slabs + double-buffered streamed blocks,
    # capped at 90% of the chip's actual VMEM capacity (v7x = 64 MiB).
    const_bytes = sum(int(t.size) * t.dtype.itemsize for t in (wa, wb, bh, bo))
    stream_bytes = bt * (2 * p_out * 4 + p_in * 2 + p_out * 4)   # ab + x + out
    need = const_bytes + 2 * stream_bytes + (4 << 20)
    vmem_limit = int(min(int(0.9 * _vmem_capacity_bytes()), max(16 << 20, need)))
    # TODO(synk): for size>=512 the resident wa slab (~33 MB bf16) is too large
    # for v7x's 64 MiB VMEM; stream K-tiles of wa/wb over an "arbitrary"
    # reduction grid axis (or store the big slabs in fp8 on v7x) instead of
    # whole-array residency.

    # Whole-array VMEM residents: fetched once, not part of the streamed
    # double-buffered pipeline (no 2x duplication of the weight slabs).
    resident = lambda: pl.BlockSpec(memory_space=pltpu.MemorySpace.VMEM)

    out = pl.pallas_call(
        _make_kernel(p_in, p_hid, p_out),
        out_shape=jax.ShapeDtypeStruct((b_pad, p_out), jnp.float32),
        grid=grid,
        in_specs=[
            pl.BlockSpec((bt, 2 * p_out), lambda g: (g, 0)),   # [a | b], f32
            pl.BlockSpec((bt, p_in), lambda g: (g, 0)),        # MLP input, bf16
            resident(),                                        # weight slab A (layers 1-3)
            resident(),                                        # weight slab B (layers 4-5)
            resident(),                                        # bias slab (layers 1-3)
            resident(),                                        # bias slab (layers 4-5)
        ],
        out_specs=pl.BlockSpec((bt, p_out), lambda g: (g, 0)),
        compiler_params=pltpu.CompilerParams(
            dimension_semantics=("parallel",),
            vmem_limit_bytes=vmem_limit),
    )(ab, x_pad, wa, wb, bh, bo)

    return out[:batch, :size]


# --------------------------- parameter setup ---------------------------------
def init_params(key, size, index_bits=DEFAULT_INDEX_BITS, extras=0, lr_mul=LR_MUL):
    """Synthetic init matching EqualLinear shapes/scaling; returns pre-scaled,
    transposed bf16 weights (in, out) and effective f32 biases (out,)."""
    sizes = [size * 2 + index_bits * (MAX_LAYERS + 1) + extras * size,
             size * 5, size * 5, size * 5, size, size]
    params = []
    for idx in range(len(sizes) - 1):
        key, kw, kb = jax.random.split(key, 3)
        in_dim, out_dim = sizes[idx], sizes[idx + 1]
        # EqualLinear: weight = randn(out, in)/lr_mul ; scale = lr_mul/sqrt(in)
        w_raw = jax.random.normal(kw, (out_dim, in_dim), jnp.float32) / lr_mul
        scale = (1.0 / math.sqrt(in_dim)) * lr_mul
        w_eff = (w_raw * scale).T.astype(jnp.bfloat16)       # (in, out) bf16
        b_raw = 0.1 * jax.random.normal(kb, (out_dim,), jnp.float32)
        b_eff = b_raw * lr_mul                               # bias * lr_mul folded in
        params.append((w_eff, b_eff))
    return params


# ---------------------------- pure-JAX reference ------------------------------
def reference_forward(a, b, params, layer_idx=None, rgb=None, extra=None,
                      index_bits=DEFAULT_INDEX_BITS):
    """Pure-JAX reference using the same bf16 weight / activation path.
    (Matches torch f32 EqualLinear to ~1e-3 relative error — bf16 weights.)"""
    size = a.shape[-1]
    a = a.reshape(-1, size).astype(jnp.float32)
    b = b.reshape(-1, size).astype(jnp.float32)
    h = build_mlp_inputs(a, b, layer_idx=layer_idx, rgb=rgb, extra=extra,
                         index_bits=index_bits).astype(jnp.bfloat16)
    n = len(params)
    for idx, (w, bias) in enumerate(params):
        y = jnp.dot(h, w, preferred_element_type=jnp.float32) + bias
        if idx < n - 1:
            y = y.astype(jnp.bfloat16)
            h = jnp.where(y >= 0, y, y * NEG_SLOPE) * LRELU_SCALE
        else:
            h = jnp.where(y >= 0.0, y, NEG_SLOPE * y) * LRELU_SCALE
    s = jax.nn.sigmoid(h)
    return a + s * (b - a)


if __name__ == "__main__":
    size = 32
    batch = MAX_LAYERS                      # one blend per StyleGAN layer (i=0..17)
    key = jax.random.PRNGKey(0)
    k_a, k_b, k_p = jax.random.split(key, 3)

    a = jax.random.normal(k_a, (batch, size), jnp.float32)
    b = jax.random.normal(k_b, (batch, size), jnp.float32)
    layer_idx = jnp.arange(batch, dtype=jnp.int32)
    rgb = (jnp.arange(batch) % 3 == 0)
    params = init_params(k_p, size)

    out = latent_blender_forward(a, b, params, layer_idx=layer_idx, rgb=rgb)
    out = jax.block_until_ready(out)

    ref = reference_forward(a, b, params, layer_idx=layer_idx, rgb=rgb)
    assert out.shape == (batch, size)
    assert jnp.allclose(out, ref, atol=2e-3, rtol=2e-3), "mismatch vs reference"

    print("KERNEL_OK")
</pallas_src>

<mosaic_0001>
module attributes {stable_mosaic.version = 11 : i64} {
  func.func @kernel(%arg0: i32, %arg1: memref<24x256xf32, #tpu.memory_space<vmem>>, %arg2: memref<24x256xbf16, #tpu.memory_space<vmem>>, %arg3: memref<768x256xbf16, #tpu.memory_space<vmem>>, %arg4: memref<384x128xbf16, #tpu.memory_space<vmem>>, %arg5: memref<3x256xf32, #tpu.memory_space<vmem>>, %arg6: memref<2x128xf32, #tpu.memory_space<vmem>>, %arg7: memref<24x128xf32, #tpu.memory_space<vmem>>) attributes {dimension_semantics = [#tpu.dimension_semantics<parallel>], iteration_bounds = array<i64: 1>, scalar_prefetch = 0 : i64, scratch_operands = 0 : i64, tpu.core_type = #tpu.core_type<tc>, window_params = [{transform_indices = @transform_0, window_bounds = array<i64: 24, 256>}, {transform_indices = @transform_1, window_bounds = array<i64: 24, 256>}, {pipeline_mode = #tpu.pipeline_mode<synchronous>, transform_indices = @transform_2, window_bounds = array<i64: 768, 256>}, {pipeline_mode = #tpu.pipeline_mode<synchronous>, transform_indices = @transform_3, window_bounds = array<i64: 384, 128>}, {pipeline_mode = #tpu.pipeline_mode<synchronous>, transform_indices = @transform_4, window_bounds = array<i64: 3, 256>}, {pipeline_mode = #tpu.pipeline_mode<synchronous>, transform_indices = @transform_5, window_bounds = array<i64: 2, 128>}, {transform_indices = @transform_6, window_bounds = array<i64: 24, 128>}]} {
    %c0 = arith.constant 0 : index
    %c0_0 = arith.constant 0 : index
    %0 = vector.load %arg2[%c0, %c0_0] : memref<24x256xbf16, #tpu.memory_space<vmem>>, vector<24x256xbf16>
    %c0_1 = arith.constant 0 : index
    %c0_2 = arith.constant 0 : index
    %1 = vector.load %arg3[%c0_1, %c0_2] : memref<768x256xbf16, #tpu.memory_space<vmem>>, vector<256x256xbf16>
    %c0_3 = arith.constant 0 : index
    %c0_4 = arith.constant 0 : index
    %2 = vector.load %arg5[%c0_3, %c0_4] : memref<3x256xf32, #tpu.memory_space<vmem>>, vector<1x256xf32>
    %cst = arith.constant dense<0.000000e+00> : vector<24x256xf32>
    %3 = tpu.matmul %0, %1, %cst {dimension_numbers = #tpu.dot_dimension_numbers<[1], [0], [0], [1], [0, 0, 1, 1], [], []>} : vector<24x256xbf16>, vector<256x256xbf16>, vector<24x256xf32> -> vector<24x256xf32>
    %4 = vector.broadcast %2 : vector<1x256xf32> to vector<24x256xf32>
    %5 = arith.addf %3, %4 : vector<24x256xf32>
    %6 = arith.truncf %5 : vector<24x256xf32> to vector<24x256xbf16>
    %cst_5 = arith.constant 0.000000e+00 : bf16
    %7 = vector.broadcast %cst_5 : bf16 to vector<24x256xbf16>
    %8 = arith.cmpf oge, %6, %7 : vector<24x256xbf16>
    %cst_6 = arith.constant 2.001950e-01 : bf16
    %9 = vector.broadcast %cst_6 : bf16 to vector<24x256xbf16>
    %10 = arith.mulf %6, %9 : vector<24x256xbf16>
    %11 = arith.select %8, %6, %10 : vector<24x256xi1>, vector<24x256xbf16>
    %cst_7 = arith.constant 1.414060e+00 : bf16
    %12 = vector.broadcast %cst_7 : bf16 to vector<24x256xbf16>
    %13 = arith.mulf %11, %12 : vector<24x256xbf16>
    %c256 = arith.constant 256 : index
    %c0_8 = arith.constant 0 : index
    %14 = vector.load %arg3[%c256, %c0_8] : memref<768x256xbf16, #tpu.memory_space<vmem>>, vector<256x256xbf16>
    %c1 = arith.constant 1 : index
    %c0_9 = arith.constant 0 : index
    %15 = vector.load %arg5[%c1, %c0_9] : memref<3x256xf32, #tpu.memory_space<vmem>>, vector<1x256xf32>
    %cst_10 = arith.constant dense<0.000000e+00> : vector<24x256xf32>
    %16 = tpu.matmul %13, %14, %cst_10 {dimension_numbers = #tpu.dot_dimension_numbers<[1], [0], [0], [1], [0, 0, 1, 1], [], []>} : vector<24x256xbf16>, vector<256x256xbf16>, vector<24x256xf32> -> vector<24x256xf32>
    %17 = vector.broadcast %15 : vector<1x256xf32> to vector<24x256xf32>
    %18 = arith.addf %16, %17 : vector<24x256xf32>
    %19 = arith.truncf %18 : vector<24x256xf32> to vector<24x256xbf16>
    %cst_11 = arith.constant 0.000000e+00 : bf16
    %20 = vector.broadcast %cst_11 : bf16 to vector<24x256xbf16>
    %21 = arith.cmpf oge, %19, %20 : vector<24x256xbf16>
    %cst_12 = arith.constant 2.001950e-01 : bf16
    %22 = vector.broadcast %cst_12 : bf16 to vector<24x256xbf16>
    %23 = arith.mulf %19, %22 : vector<24x256xbf16>
    %24 = arith.select %21, %19, %23 : vector<24x256xi1>, vector<24x256xbf16>
    %cst_13 = arith.constant 1.414060e+00 : bf16
    %25 = vector.broadcast %cst_13 : bf16 to vector<24x256xbf16>
    %26 = arith.mulf %24, %25 : vector<24x256xbf16>
    %c512 = arith.constant 512 : index
    %c0_14 = arith.constant 0 : index
    %27 = vector.load %arg3[%c512, %c0_14] : memref<768x256xbf16, #tpu.memory_space<vmem>>, vector<256x256xbf16>
    %c2 = arith.constant 2 : index
    %c0_15 = arith.constant 0 : index
    %28 = vector.load %arg5[%c2, %c0_15] : memref<3x256xf32, #tpu.memory_space<vmem>>, vector<1x256xf32>
    %cst_16 = arith.constant dense<0.000000e+00> : vector<24x256xf32>
    %29 = tpu.matmul %26, %27, %cst_16 {dimension_numbers = #tpu.dot_dimension_numbers<[1], [0], [0], [1], [0, 0, 1, 1], [], []>} : vector<24x256xbf16>, vector<256x256xbf16>, vector<24x256xf32> -> vector<24x256xf32>
    %30 = vector.broadcast %28 : vector<1x256xf32> to vector<24x256xf32>
    %31 = arith.addf %29, %30 : vector<24x256xf32>
    %32 = arith.truncf %31 : vector<24x256xf32> to vector<24x256xbf16>
    %cst_17 = arith.constant 0.000000e+00 : bf16
    %33 = vector.broadcast %cst_17 : bf16 to vector<24x256xbf16>
    %34 = arith.cmpf oge, %32, %33 : vector<24x256xbf16>
    %cst_18 = arith.constant 2.001950e-01 : bf16
    %35 = vector.broadcast %cst_18 : bf16 to vector<24x256xbf16>
    %36 = arith.mulf %32, %35 : vector<24x256xbf16>
    %37 = arith.select %34, %32, %36 : vector<24x256xi1>, vector<24x256xbf16>
    %cst_19 = arith.constant 1.414060e+00 : bf16
    %38 = vector.broadcast %cst_19 : bf16 to vector<24x256xbf16>
    %39 = arith.mulf %37, %38 : vector<24x256xbf16>
    %c0_20 = arith.constant 0 : index
    %c0_21 = arith.constant 0 : index
    %40 = vector.load %arg4[%c0_20, %c0_21] : memref<384x128xbf16, #tpu.memory_space<vmem>>, vector<256x128xbf16>
    %c0_22 = arith.constant 0 : index
    %c0_23 = arith.constant 0 : index
    %41 = vector.load %arg6[%c0_22, %c0_23] : memref<2x128xf32, #tpu.memory_space<vmem>>, vector<1x128xf32>
    %cst_24 = arith.constant dense<0.000000e+00> : vector<24x128xf32>
    %42 = tpu.matmul %39, %40, %cst_24 {dimension_numbers = #tpu.dot_dimension_numbers<[1], [0], [0], [1], [0, 0, 1, 1], [], []>} : vector<24x256xbf16>, vector<256x128xbf16>, vector<24x128xf32> -> vector<24x128xf32>
    %43 = vector.broadcast %41 : vector<1x128xf32> to vector<24x128xf32>
    %44 = arith.addf %42, %43 : vector<24x128xf32>
    %45 = arith.truncf %44 : vector<24x128xf32> to vector<24x128xbf16>
    %cst_25 = arith.constant 0.000000e+00 : bf16
    %46 = vector.broadcast %cst_25 : bf16 to vector<24x128xbf16>
    %47 = arith.cmpf oge, %45, %46 : vector<24x128xbf16>
    %cst_26 = arith.constant 2.001950e-01 : bf16
    %48 = vector.broadcast %cst_26 : bf16 to vector<24x128xbf16>
    %49 = arith.mulf %45, %48 : vector<24x128xbf16>
    %50 = arith.select %47, %45, %49 : vector<24x128xi1>, vector<24x128xbf16>
    %cst_27 = arith.constant 1.414060e+00 : bf16
    %51 = vector.broadcast %cst_27 : bf16 to vector<24x128xbf16>
    %52 = arith.mulf %50, %51 : vector<24x128xbf16>
    %c256_28 = arith.constant 256 : index
    %c0_29 = arith.constant 0 : index
    %53 = vector.load %arg4[%c256_28, %c0_29] : memref<384x128xbf16, #tpu.memory_space<vmem>>, vector<128x128xbf16>
    %cst_30 = arith.constant dense<0.000000e+00> : vector<24x128xf32>
    %54 = tpu.matmul %52, %53, %cst_30 {dimension_numbers = #tpu.dot_dimension_numbers<[1], [0], [0], [1], [0, 0, 1, 1], [], []>} : vector<24x128xbf16>, vector<128x128xbf16>, vector<24x128xf32> -> vector<24x128xf32>
    %c1_31 = arith.constant 1 : index
    %c0_32 = arith.constant 0 : index
    %55 = vector.load %arg6[%c1_31, %c0_32] : memref<2x128xf32, #tpu.memory_space<vmem>>, vector<1x128xf32>
    %56 = vector.broadcast %55 : vector<1x128xf32> to vector<24x128xf32>
    %57 = arith.addf %54, %56 : vector<24x128xf32>
    %cst_33 = arith.constant 0.000000e+00 : f32
    %58 = vector.broadcast %cst_33 : f32 to vector<24x128xf32>
    %59 = arith.cmpf oge, %57, %58 : vector<24x128xf32>
    %cst_34 = arith.constant 2.000000e-01 : f32
    %60 = vector.broadcast %cst_34 : f32 to vector<24x128xf32>
    %61 = arith.mulf %60, %57 : vector<24x128xf32>
    %62 = arith.select %59, %57, %61 : vector<24x128xi1>, vector<24x128xf32>
    %cst_35 = arith.constant 1.41421354 : f32
    %63 = vector.broadcast %cst_35 : f32 to vector<24x128xf32>
    %64 = arith.mulf %62, %63 : vector<24x128xf32>
    %65 = arith.negf %64 : vector<24x128xf32>
    %66 = math.exp %65 : vector<24x128xf32>
    %cst_36 = arith.constant 1.000000e+00 : f32
    %67 = vector.broadcast %cst_36 : f32 to vector<24x128xf32>
    %68 = arith.addf %67, %66 : vector<24x128xf32>
    %69 = arith.divf %67, %68 : vector<24x128xf32>
    %c0_37 = arith.constant 0 : index
    %c0_38 = arith.constant 0 : index
    %70 = vector.load %arg1[%c0_37, %c0_38] : memref<24x256xf32, #tpu.memory_space<vmem>>, vector<24x128xf32>
    %c0_39 = arith.constant 0 : index
    %c128 = arith.constant 128 : index
    %71 = vector.load %arg1[%c0_39, %c128] : memref<24x256xf32, #tpu.memory_space<vmem>>, vector<24x128xf32>
    %72 = arith.subf %71, %70 : vector<24x128xf32>
    %73 = arith.mulf %69, %72 : vector<24x128xf32>
    %74 = arith.addf %70, %73 : vector<24x128xf32>
    %c0_40 = arith.constant 0 : index
    %c0_41 = arith.constant 0 : index
    %75 = vector.load %arg7[%c0_40, %c0_41] : memref<24x128xf32, #tpu.memory_space<vmem>>, vector<24x128xf32>
    tpu.vector_store %arg7[%c0_40, %c0_41], %74 {strides = array<i32>} : memref<24x128xf32, #tpu.memory_space<vmem>>, vector<24x128xf32>,
    return
  }
  func.func @transform_0(%arg0: i32) -> (i32, i32) {
    %c0_i32 = arith.constant 0 : i32
    %c0_i32_0 = arith.constant 0 : i32
    return %arg0, %c0_i32 : i32, i32
  }
  func.func @transform_1(%arg0: i32) -> (i32, i32) {
    %c0_i32 = arith.constant 0 : i32
    %c0_i32_0 = arith.constant 0 : i32
    return %arg0, %c0_i32 : i32, i32
  }
  func.func @transform_2(%arg0: i32) -> (i32, i32) {
    %c0_i32 = arith.constant 0 : i32
    %c0_i32_0 = arith.constant 0 : i32
    %c0_i32_1 = arith.constant 0 : i32
    return %c0_i32, %c0_i32_0 : i32, i32
  }
  func.func @transform_3(%arg0: i32) -> (i32, i32) {
    %c0_i32 = arith.constant 0 : i32
    %c0_i32_0 = arith.constant 0 : i32
    %c0_i32_1 = arith.constant 0 : i32
    return %c0_i32, %c0_i32_0 : i32, i32
  }
  func.func @transform_4(%arg0: i32) -> (i32, i32) {
    %c0_i32 = arith.constant 0 : i32
    %c0_i32_0 = arith.constant 0 : i32
    %c0_i32_1 = arith.constant 0 : i32
    return %c0_i32, %c0_i32_0 : i32, i32
  }
  func.func @transform_5(%arg0: i32) -> (i32, i32) {
    %c0_i32 = arith.constant 0 : i32
    %c0_i32_0 = arith.constant 0 : i32
    %c0_i32_1 = arith.constant 0 : i32
    return %c0_i32, %c0_i32_0 : i32, i32
  }
  func.func @transform_6(%arg0: i32) -> (i32, i32) {
    %c0_i32 = arith.constant 0 : i32
    %c0_i32_0 = arith.constant 0 : i32
    return %arg0, %c0_i32 : i32, i32
  }
}

</mosaic_0001>

<llo_original>
// kernel: tpu_custom_call.1
$region0: #{tpu_custom_call.1}
  #allocation0 [shape = 'u32[]', space=smem, size = 0x4, offset = 0x4, fixed_abs, tag = 'smem constant byte address 0x4 - core index']
  #allocation1 [shape = 'u32[144,128]{1,0:T(1,128)}', space=vmem, size = 0x12000, scoped, tag = 'internal scratch']
  %s0 = inlined_call_operand.hbm [shape: f32[24,256], index: 0, kind: input, shape index: {}]
  %s1 = inlined_call_operand.hbm [shape: bf16[24,256], index: 1, kind: input, shape index: {}]
  %s2 = inlined_call_operand.hbm [shape: bf16[768,256], index: 2, kind: input, shape index: {}]
  %s3 = inlined_call_operand.hbm [shape: bf16[384,128], index: 3, kind: input, shape index: {}]
  %s4 = inlined_call_operand.vmem [shape: f32[3,256], index: 4, kind: input, shape index: {}]
  %s5 = inlined_call_operand.vmem [shape: f32[2,128], index: 5, kind: input, shape index: {}]
  %s6 = inlined_call_operand.hbm [shape: f32[24,128], index: 6, kind: output, shape index: {}]
  %s7 = sld [smem:[#allocation0]]
  $region50: #{tpu_custom_call.1} parent=0
    _
  %s9 = ssub.s32 1, %s7
  %s10 = scalar_select 0, %s9, %s7
  $region1: #{tpu_custom_call.1} parent=0
    #allocation2 [shape = 'u8[24576]{0}', space=vmem, size = 0x6000, scoped, tag = 'input window, operand 0, single buffered']
    #allocation3 [shape = 's32[1]{0}', space=sflag, size = 0x4, scoped, tag = 'scoped memory for tpu_custom_call.1']
    #allocation4 [shape = 's32[1]{0}', space=sflag, size = 0x4, scoped, tag = 'scoped memory for tpu_custom_call.1']
    #allocation5 [shape = 'u8[12288]{0}', space=vmem, size = 0x3000, scoped, tag = 'input window, operand 1, single buffered']
    #allocation6 [shape = 's32[1]{0}', space=sflag, size = 0x4, scoped, tag = 'scoped memory for tpu_custom_call.1']
    #allocation7 [shape = 'u8[393216]{0}', space=vmem, size = 0x60000, scoped, tag = 'input window, operand 2, single buffered']
    #allocation8 [shape = 'u8[98304]{0}', space=vmem, size = 0x18000, scoped, tag = 'input window, operand 3, single buffered']
    #allocation9 [shape = 's32[1]{0}', space=sflag, size = 0x4, scoped, tag = 'scoped memory for tpu_custom_call.1']
    #allocation10 [shape = 'u8[12288]{0}', space=vmem, size = 0x3000, scoped, tag = 'output window, operand 0, single buffered']
    %11 = vsyncpa [#allocation3], 0
    %12 = vsyncpa [#allocation6], 0
    %13 = vsyncpa [#allocation9], 0
    %14 = vsyncpa [#allocation4], 0
    // Predicated region
    $region2: #{tpu_custom_call.1} parent=1 // pred_check
      _
    $region3: #{tpu_custom_call.1} parent=1 // pred_check_branch
      %16 = sbr.rel (0) target = $region5
    $region4: #{tpu_custom_call.1} parent=1 // pred_region
      %s18 = ssub.s32 768, 768
      %19 = vsyncadd [#allocation3], %s18
      %s20 = sshll.u32 [#allocation2], 4
      %s21 = int_to_ptr.vmem [resolvable:$true] %s20
      %26 = dma.hbm_to_vmem [thread:$0]  %s0, 768, %s21, [#allocation3], 256, 256, 16
    $region5: #{tpu_custom_call.1} parent=1 // pred_fallthru
      _
    // Predicated region
    $region6: #{tpu_custom_call.1} parent=1 // pred_check
      _
    $region7: #{tpu_custom_call.1} parent=1 // pred_check_branch
      %28 = sbr.rel (0) target = $region9
    $region8: #{tpu_custom_call.1} parent=1 // pred_region
      %s30 = ssub.s32 384, 384
      %31 = vsyncadd [#allocation6], %s30
      %s32 = sshll.u32 [#allocation5], 4
      %s33 = int_to_ptr.vmem [resolvable:$true] %s32
      %38 = dma.hbm_to_vmem [thread:$0]  %s1, 384, %s33, [#allocation6], 128, 128, 8
    $region9: #{tpu_custom_call.1} parent=1 // pred_fallthru
      _
    // Predicated region
    $region10: #{tpu_custom_call.1} parent=1 // pred_check
      _
    $region11: #{tpu_custom_call.1} parent=1 // pred_check_branch
      %40 = sbr.rel (0) target = $region13
    $region12: #{tpu_custom_call.1} parent=1 // pred_region
      %s42 = ssub.s32 12288, 12288
      %43 = vsyncadd [#allocation6], %s42
      %s44 = sshll.u32 [#allocation7], 4
      %s45 = int_to_ptr.vmem [resolvable:$true] %s44
      %50 = dma.hbm_to_vmem [thread:$0]  %s2, 12288, %s45, [#allocation6], 128, 128, 8
    $region13: #{tpu_custom_call.1} parent=1 // pred_fallthru
      _
    // Predicated region
    $region14: #{tpu_custom_call.1} parent=1 // pred_check
      _
    $region15: #{tpu_custom_call.1} parent=1 // pred_check_branch
      %52 = sbr.rel (0) target = $region17
    $region16: #{tpu_custom_call.1} parent=1 // pred_region
      %s54 = ssub.s32 3072, 3072
      %55 = vsyncadd [#allocation9], %s54
      %s56 = sshll.u32 [#allocation8], 4
      %s57 = int_to_ptr.vmem [resolvable:$true] %s56
      %62 = dma.hbm_to_vmem [thread:$0]  %s3, 3072, %s57, [#allocation9], 64, 64, 4
    $region17: #{tpu_custom_call.1} parent=1 // pred_fallthru
      _
    // Predicated region
    $region18: #{tpu_custom_call.1} parent=1 // pred_check
      _
    $region19: #{tpu_custom_call.1} parent=1 // pred_check_branch
      %64 = sbr.rel (0) target = $region21
    $region20: #{tpu_custom_call.1} parent=1 // pred_region
      _
    $region21: #{tpu_custom_call.1} parent=1 // pred_fallthru
      _
    // Predicated region
    $region22: #{tpu_custom_call.1} parent=1 // pred_check
      _
    $region23: #{tpu_custom_call.1} parent=1 // pred_check_branch
      %66 = sbr.rel (0) target = $region25
    $region24: #{tpu_custom_call.1} parent=1 // pred_region
      _
    $region25: #{tpu_custom_call.1} parent=1 // pred_fallthru
      _
    // Predicated region
    $region26: #{tpu_custom_call.1} parent=1 // pred_check
      _
    $region27: #{tpu_custom_call.1} parent=1 // pred_check_branch
      %68 = sbr.rel (0) target = $region29
    $region28: #{tpu_custom_call.1} parent=1 // pred_region
      %69 = dma.done [#allocation3], 768
    $region29: #{tpu_custom_call.1} parent=1 // pred_fallthru
      _
    // Predicated region
    $region30: #{tpu_custom_call.1} parent=1 // pred_check
      _
    $region31: #{tpu_custom_call.1} parent=1 // pred_check_branch
      %71 = sbr.rel (0) target = $region33
    $region32: #{tpu_custom_call.1} parent=1 // pred_region
      %72 = dma.done [#allocation6], 384
    $region33: #{tpu_custom_call.1} parent=1 // pred_fallthru
      _
    // Predicated region
    $region34: #{tpu_custom_call.1} parent=1 // pred_check
      _
    $region35: #{tpu_custom_call.1} parent=1 // pred_check_branch
      %74 = sbr.rel (0) target = $region37
    $region36: #{tpu_custom_call.1} parent=1 // pred_region
      %75 = dma.done [#allocation6], 12288
    $region37: #{tpu_custom_call.1} parent=1 // pred_fallthru
      _
    // Predicated region
    $region38: #{tpu_custom_call.1} parent=1 // pred_check
      _
    $region39: #{tpu_custom_call.1} parent=1 // pred_check_branch
      %77 = sbr.rel (0) target = $region41
    $region40: #{tpu_custom_call.1} parent=1 // pred_region
      %78 = dma.done [#allocation9], 3072
    $region41: #{tpu_custom_call.1} parent=1 // pred_fallthru
      _
    %v82 = vld [vmem:[#allocation5] sm:$0xff]
    %v83 = vld [vmem:[#allocation5 + $0x8] sm:$0xff]
    %v84 = vld [vmem:[#allocation5 + $0x10] sm:$0xff]
    %v85 = vld [vmem:[#allocation7] sm:$0xff]
    %v86 = vld [vmem:[#allocation7 + $0x8] sm:$0xff]
    %v87 = vld [vmem:[#allocation7 + $0x10] sm:$0xff]
    %v88 = vld [vmem:[#allocation7 + $0x18] sm:$0xff]
    %v89 = vld [vmem:[#allocation7 + $0x20] sm:$0xff]
    %v90 = vld [vmem:[#allocation7 + $0x28] sm:$0xff]
    %v91 = vld [vmem:[#allocation7 + $0x30] sm:$0xff]
    %v92 = vld [vmem:[#allocation7 + $0x38] sm:$0xff]
    %v93 = vld [vmem:[#allocation7 + $0x40] sm:$0xff]
    %v94 = vld [vmem:[#allocation7 + $0x48] sm:$0xff]
    %v95 = vld [vmem:[#allocation7 + $0x50] sm:$0xff]
    %v96 = vld [vmem:[#allocation7 + $0x58] sm:$0xff]
    %v97 = vld [vmem:[#allocation7 + $0x60] sm:$0xff]
    %v98 = vld [vmem:[#allocation7 + $0x68] sm:$0xff]
    %v99 = vld [vmem:[#allocation7 + $0x70] sm:$0xff]
    %v100 = vld [vmem:[#allocation7 + $0x78] sm:$0xff]
    %v101 = vld [vmem:[#allocation7 + $0x80] sm:$0xff]
    %v102 = vld [vmem:[#allocation7 + $0x88] sm:$0xff]
    %v103 = vld [vmem:[#allocation7 + $0x90] sm:$0xff]
    %v104 = vld [vmem:[#allocation7 + $0x98] sm:$0xff]
    %v105 = vld [vmem:[#allocation7 + $0xa0] sm:$0xff]
    %v106 = vld [vmem:[#allocation7 + $0xa8] sm:$0xff]
    %v107 = vld [vmem:[#allocation7 + $0xb0] sm:$0xff]
    %v108 = vld [vmem:[#allocation7 + $0xb8] sm:$0xff]
    %v109 = vld [vmem:[#allocation7 + $0xc0] sm:$0xff]
    %v110 = vld [vmem:[#allocation7 + $0xc8] sm:$0xff]
    %v111 = vld [vmem:[#allocation7 + $0xd0] sm:$0xff]
    %v112 = vld [vmem:[#allocation7 + $0xd8] sm:$0xff]
    %v113 = vld [vmem:[#allocation7 + $0xe0] sm:$0xff]
    %v114 = vld [vmem:[#allocation7 + $0xe8] sm:$0xff]
    %v115 = vld [vmem:[#allocation7 + $0xf0] sm:$0xff]
    %v116 = vld [vmem:[#allocation7 + $0xf8] sm:$0xff]
    %v117 = vld [vmem:[%s4] ss:$4 sm:$0x3]
    %v119 = vlaneseq
    %v120 = vshrl.u32 %v119, 7
    %v121 = vsub.s32 0, %v120
    %v122 = vrot.slane %v117, %v121
    %v123 = vlaneseq
    %v124 = vshrl.u32 %v123, 7
    %v125 = vsub.s32 1, %v124
    %v126 = vrot.slane %v117, %v125
    %v132 = vunpack.c.l.b16 %v82
    %v133 = vunpack.c.h.b16 %v82
    %v134 = vunpack.c.l.b16 %v83
    %v135 = vunpack.c.h.b16 %v83
    %v136 = vunpack.c.l.b16 %v84
    %v137 = vunpack.c.h.b16 %v84
    %v138 = vpack.c.b16 %v134, %v132
    %v139 = vpack.c.b16 %v135, %v133
    %v140 = vpack.c.b16 %v136, %v136
    %v141 = vpack.c.b16 %v137, %v137
    %v178 = vunpack.c.l.b16 %v85
    %v179 = vunpack.c.h.b16 %v85
    %v180 = vunpack.c.l.b16 %v86
    %v181 = vunpack.c.h.b16 %v86
    %v182 = vunpack.c.l.b16 %v87
    %v183 = vunpack.c.h.b16 %v87
    %v184 = vunpack.c.l.b16 %v88
    %v185 = vunpack.c.h.b16 %v88
    %v186 = vunpack.c.l.b16 %v89
    %v187 = vunpack.c.h.b16 %v89
    %v188 = vunpack.c.l.b16 %v90
    %v189 = vunpack.c.h.b16 %v90
    %v190 = vunpack.c.l.b16 %v91
    %v191 = vunpack.c.h.b16 %v91
    %v192 = vunpack.c.l.b16 %v92
    %v193 = vunpack.c.h.b16 %v92
    %v194 = vunpack.c.l.b16 %v93
    %v195 = vunpack.c.h.b16 %v93
    %v196 = vunpack.c.l.b16 %v94
    %v197 = vunpack.c.h.b16 %v94
    %v198 = vunpack.c.l.b16 %v95
    %v199 = vunpack.c.h.b16 %v95
    %v200 = vunpack.c.l.b16 %v96
    %v201 = vunpack.c.h.b16 %v96
    %v202 = vunpack.c.l.b16 %v97
    %v203 = vunpack.c.h.b16 %v97
    %v204 = vunpack.c.l.b16 %v98
    %v205 = vunpack.c.h.b16 %v98
    %v206 = vunpack.c.l.b16 %v99
    %v207 = vunpack.c.h.b16 %v99
    %v208 = vunpack.c.l.b16 %v100
    %v209 = vunpack.c.h.b16 %v100
    %v210 = vunpack.c.l.b16 %v101
    %v211 = vunpack.c.h.b16 %v101
    %v212 = vunpack.c.l.b16 %v102
    %v213 = vunpack.c.h.b16 %v102
    %v214 = vunpack.c.l.b16 %v103
    %v215 = vunpack.c.h.b16 %v103
    %v216 = vunpack.c.l.b16 %v104
    %v217 = vunpack.c.h.b16 %v104
    %v218 = vunpack.c.l.b16 %v105
    %v219 = vunpack.c.h.b16 %v105
    %v220 = vunpack.c.l.b16 %v106
    %v221 = vunpack.c.h.b16 %v106
    %v222 = vunpack.c.l.b16 %v107
    %v223 = vunpack.c.h.b16 %v107
    %v224 = vunpack.c.l.b16 %v108
    %v225 = vunpack.c.h.b16 %v108
    %v226 = vunpack.c.l.b16 %v109
    %v227 = vunpack.c.h.b16 %v109
    %v228 = vunpack.c.l.b16 %v110
    %v229 = vunpack.c.h.b16 %v110
    %v230 = vunpack.c.l.b16 %v111
    %v231 = vunpack.c.h.b16 %v111
    %v232 = vunpack.c.l.b16 %v112
    %v233 = vunpack.c.h.b16 %v112
    %v234 = vunpack.c.l.b16 %v113
    %v235 = vunpack.c.h.b16 %v113
    %v236 = vunpack.c.l.b16 %v114
    %v237 = vunpack.c.h.b16 %v114
    %v238 = vunpack.c.l.b16 %v115
    %v239 = vunpack.c.h.b16 %v115
    %v240 = vunpack.c.l.b16 %v116
    %v241 = vunpack.c.h.b16 %v116
    %v242 = vpack.c.b16 %v180, %v178
    %v243 = vpack.c.b16 %v181, %v179
    %v244 = vpack.c.b16 %v184, %v182
    %v245 = vpack.c.b16 %v185, %v183
    %v246 = vpack.c.b16 %v188, %v186
    %v247 = vpack.c.b16 %v189, %v187
    %v248 = vpack.c.b16 %v192, %v190
    %v249 = vpack.c.b16 %v193, %v191
    %v250 = vpack.c.b16 %v196, %v194
    %v251 = vpack.c.b16 %v197, %v195
    %v252 = vpack.c.b16 %v200, %v198
    %v253 = vpack.c.b16 %v201, %v199
    %v254 = vpack.c.b16 %v204, %v202
    %v255 = vpack.c.b16 %v205, %v203
    %v256 = vpack.c.b16 %v208, %v206
    %v257 = vpack.c.b16 %v209, %v207
    %v258 = vpack.c.b16 %v212, %v210
    %v259 = vpack.c.b16 %v213, %v211
    %v260 = vpack.c.b16 %v216, %v214
    %v261 = vpack.c.b16 %v217, %v215
    %v262 = vpack.c.b16 %v220, %v218
    %v263 = vpack.c.b16 %v221, %v219
    %v264 = vpack.c.b16 %v224, %v222
    %v265 = vpack.c.b16 %v225, %v223
    %v266 = vpack.c.b16 %v228, %v226
    %v267 = vpack.c.b16 %v229, %v227
    %v268 = vpack.c.b16 %v232, %v230
    %v269 = vpack.c.b16 %v233, %v231
    %v270 = vpack.c.b16 %v236, %v234
    %v271 = vpack.c.b16 %v237, %v235
    %v272 = vpack.c.b16 %v240, %v238
    %v273 = vpack.c.b16 %v241, %v239
    %306 = vmatprep.subr.bf16.mxu0 %v243
    %307 = vmatpush1.bf16.msra.mxu0 %v242
    %308 = vmatprep.subr.bf16.mxu0 %v245
    %309 = vmatpush1.bf16.msra.mxu0 %v244
    %310 = vmatprep.subr.bf16.mxu0 %v247
    %311 = vmatpush1.bf16.msra.mxu0 %v246
    %312 = vmatprep.subr.bf16.mxu0 %v249
    %313 = vmatpush1.bf16.msra.mxu0 %v248
    %314 = vmatprep.subr.bf16.mxu0 %v251
    %315 = vmatpush1.bf16.msra.mxu0 %v250
    %316 = vmatprep.subr.bf16.mxu0 %v253
    %317 = vmatpush1.bf16.msra.mxu0 %v252
    %318 = vmatprep.subr.bf16.mxu0 %v255
    %319 = vmatpush1.bf16.msra.mxu0 %v254
    %320 = vmatprep.subr.bf16.mxu0 %v257
    %321 = vmatpush1.bf16.msra.mxu0 %v256
    %322 = vmatprep.subr.bf16.mxu0 %v259
    %323 = vmatpush1.bf16.msra.mxu0 %v258
    %324 = vmatprep.subr.bf16.mxu0 %v261
    %325 = vmatpush1.bf16.msra.mxu0 %v260
    %326 = vmatprep.subr.bf16.mxu0 %v263
    %327 = vmatpush1.bf16.msra.mxu0 %v262
    %328 = vmatprep.subr.bf16.mxu0 %v265
    %329 = vmatpush1.bf16.msra.mxu0 %v264
    %330 = vmatprep.subr.bf16.mxu0 %v267
    %331 = vmatpush1.bf16.msra.mxu0 %v266
    %332 = vmatprep.subr.bf16.mxu0 %v269
    %333 = vmatpush1.bf16.msra.mxu0 %v268
    %334 = vmatprep.subr.bf16.mxu0 %v271
    %335 = vmatpush1.bf16.msra.mxu0 %v270
    %336 = vmatprep.subr.bf16.mxu0 %v273
    %337 = vmatpush1.bf16.msra.mxu0 %v272
    %338 = vmatprep.mubr.bf16.mxu0 %v139
    %339 = vmatmul.mubr.bf16.gmra.mrb[0].mxu0 %v138
    %v340 = vpop.f32.mrb[0].mxu0
    %v341 = vadd.f32 %v122, %v340
    %v342 = vpop.f32.mrb[0].mxu0
    %v343 = vadd.f32 %v126, %v342
    %v344 = vpop.f32.mrb[0].mxu0
    %v345 = vadd.f32 %v122, %v344
    %v346 = vpop.f32.mrb[0].mxu0
    %v347 = vadd.f32 %v126, %v346
    %348 = vmatprep.mubr.bf16.mxu0 %v141
    %349 = vmatmul.mubr.bf16.gmra.mrb[0].mxu0 %v140
    %v350 = vpop.f32.mrb[0].mxu0
    %v351 = vadd.f32 %v122, %v350
    %v352 = vpop.f32.mrb[0].mxu0
    %v353 = vadd.f32 %v126, %v352
    %v354 = vpop.f32.mrb[0].mxu0
    %v355 = vpop.f32.mrb[0].mxu0
    %356 = vdwg.mxu0
    %v357 = vpack.c.bf16 %v345, %v341
    %v358 = vpack.c.bf16 %v347, %v343
    %v359 = vpack.c.bf16 %v351, %v351
    %v360 = vpack.c.bf16 %v353, %v353
    %vm361 = vcmp.ge.bf16.partialorder %v357, 0
    %vm362 = vcmp.ge.bf16.partialorder %v358, 0
    %vm363 = vcmp.ge.bf16.partialorder %v359, 0
    %vm364 = vcmp.ge.bf16.partialorder %v360, 0
    %v365 = vmul.bf16 %v357, 1045249613
    %v366 = vmul.bf16 %v358, 1045249613
    %v367 = vmul.bf16 %v359, 1045249613
    %v368 = vmul.bf16 %v360, 1045249613
    %v369 = vsel %vm361, %v357, %v365
    %v370 = vsel %vm362, %v358, %v366
    %v371 = vsel %vm363, %v359, %v367
    %v372 = vsel %vm364, %v360, %v368
    %v373 = vmul.bf16 %v369, 1068842933
    %v374 = vmul.bf16 %v370, 1068842933
    %v375 = vmul.bf16 %v371, 1068842933
    %v376 = vmul.bf16 %v372, 1068842933
    %v377 = vld [vmem:[#allocation7 + $0x100] sm:$0xff]
    %v378 = vld [vmem:[#allocation7 + $0x108] sm:$0xff]
    %v379 = vld [vmem:[#allocation7 + $0x110] sm:$0xff]
    %v380 = vld [vmem:[#allocation7 + $0x118] sm:$0xff]
    %v381 = vld [vmem:[#allocation7 + $0x120] sm:$0xff]
    %v382 = vld [vmem:[#allocation7 + $0x128] sm:$0xff]
    %v383 = vld [vmem:[#allocation7 + $0x130] sm:$0xff]
    %v384 = vld [vmem:[#allocation7 + $0x138] sm:$0xff]
    %v385 = vld [vmem:[#allocation7 + $0x140] sm:$0xff]
    %v386 = vld [vmem:[#allocation7 + $0x148] sm:$0xff]
    %v387 = vld [vmem:[#allocation7 + $0x150] sm:$0xff]
    %v388 = vld [vmem:[#allocation7 + $0x158] sm:$0xff]
    %v389 = vld [vmem:[#allocation7 + $0x160] sm:$0xff]
    %v390 = vld [vmem:[#allocation7 + $0x168] sm:$0xff]
    %v391 = vld [vmem:[#allocation7 + $0x170] sm:$0xff]
    %v392 = vld [vmem:[#allocation7 + $0x178] sm:$0xff]
    %v393 = vld [vmem:[#allocation7 + $0x180] sm:$0xff]
    %v394 = vld [vmem:[#allocation7 + $0x188] sm:$0xff]
    %v395 = vld [vmem:[#allocation7 + $0x190] sm:$0xff]
    %v396 = vld [vmem:[#allocation7 + $0x198] sm:$0xff]
    %v397 = vld [vmem:[#allocation7 + $0x1a0] sm:$0xff]
    %v398 = vld [vmem:[#allocation7 + $0x1a8] sm:$0xff]
    %v399 = vld [vmem:[#allocation7 + $0x1b0] sm:$0xff]
    %v400 = vld [vmem:[#allocation7 + $0x1b8] sm:$0xff]
    %v401 = vld [vmem:[#allocation7 + $0x1c0] sm:$0xff]
    %v402 = vld [vmem:[#allocation7 + $0x1c8] sm:$0xff]
    %v403 = vld [vmem:[#allocation7 + $0x1d0] sm:$0xff]
    %v404 = vld [vmem:[#allocation7 + $0x1d8] sm:$0xff]
    %v405 = vld [vmem:[#allocation7 + $0x1e0] sm:$0xff]
    %v406 = vld [vmem:[#allocation7 + $0x1e8] sm:$0xff]
    %v407 = vld [vmem:[#allocation7 + $0x1f0] sm:$0xff]
    %v408 = vld [vmem:[#allocation7 + $0x1f8] sm:$0xff]
    %s409 = scalar_lea.vmem %s4, 1
    %v410 = vld [vmem:[%s409] ss:$4 sm:$0x3]
    %v412 = vlaneseq
    %v413 = vshrl.u32 %v412, 7
    %v414 = vsub.s32 0, %v413
    %v415 = vrot.slane %v410, %v414
    %v416 = vlaneseq
    %v417 = vshrl.u32 %v416, 7
    %v418 = vsub.s32 1, %v417
    %v419 = vrot.slane %v410, %v418
    %v454 = vunpack.c.l.b16 %v377
    %v455 = vunpack.c.h.b16 %v377
    %v456 = vunpack.c.l.b16 %v378
    %v457 = vunpack.c.h.b16 %v378
    %v458 = vunpack.c.l.b16 %v379
    %v459 = vunpack.c.h.b16 %v379
    %v460 = vunpack.c.l.b16 %v380
    %v461 = vunpack.c.h.b16 %v380
    %v462 = vunpack.c.l.b16 %v381
    %v463 = vunpack.c.h.b16 %v381
    %v464 = vunpack.c.l.b16 %v382
    %v465 = vunpack.c.h.b16 %v382
    %v466 = vunpack.c.l.b16 %v383
    %v467 = vunpack.c.h.b16 %v383
    %v468 = vunpack.c.l.b16 %v384
    %v469 = vunpack.c.h.b16 %v384
    %v470 = vunpack.c.l.b16 %v385
    %v471 = vunpack.c.h.b16 %v385
    %v472 = vunpack.c.l.b16 %v386
    %v473 = vunpack.c.h.b16 %v386
    %v474 = vunpack.c.l.b16 %v387
    %v475 = vunpack.c.h.b16 %v387
    %v476 = vunpack.c.l.b16 %v388
    %v477 = vunpack.c.h.b16 %v388
    %v478 = vunpack.c.l.b16 %v389
    %v479 = vunpack.c.h.b16 %v389
    %v480 = vunpack.c.l.b16 %v390
    %v481 = vunpack.c.h.b16 %v390
    %v482 = vunpack.c.l.b16 %v391
    %v483 = vunpack.c.h.b16 %v391
    %v484 = vunpack.c.l.b16 %v392
    %v485 = vunpack.c.h.b16 %v392
    %v486 = vunpack.c.l.b16 %v393
    %v487 = vunpack.c.h.b16 %v393
    %v488 = vunpack.c.l.b16 %v394
    %v489 = vunpack.c.h.b16 %v394
    %v490 = vunpack.c.l.b16 %v395
    %v491 = vunpack.c.h.b16 %v395
    %v492 = vunpack.c.l.b16 %v396
    %v493 = vunpack.c.h.b16 %v396
    %v494 = vunpack.c.l.b16 %v397
    %v495 = vunpack.c.h.b16 %v397
    %v496 = vunpack.c.l.b16 %v398
    %v497 = vunpack.c.h.b16 %v398
    %v498 = vunpack.c.l.b16 %v399
    %v499 = vunpack.c.h.b16 %v399
    %v500 = vunpack.c.l.b16 %v400
    %v501 = vunpack.c.h.b16 %v400
    %v502 = vunpack.c.l.b16 %v401
    %v503 = vunpack.c.h.b16 %v401
    %v504 = vunpack.c.l.b16 %v402
    %v505 = vunpack.c.h.b16 %v402
    %v506 = vunpack.c.l.b16 %v403
    %v507 = vunpack.c.h.b16 %v403
    %v508 = vunpack.c.l.b16 %v404
    %v509 = vunpack.c.h.b16 %v404
    %v510 = vunpack.c.l.b16 %v405
    %v511 = vunpack.c.h.b16 %v405
    %v512 = vunpack.c.l.b16 %v406
    %v513 = vunpack.c.h.b16 %v406
    %v514 = vunpack.c.l.b16 %v407
    %v515 = vunpack.c.h.b16 %v407
    %v516 = vunpack.c.l.b16 %v408
    %v517 = vunpack.c.h.b16 %v408
    %v518 = vpack.c.b16 %v456, %v454
    %v519 = vpack.c.b16 %v457, %v455
    %v520 = vpack.c.b16 %v460, %v458
    %v521 = vpack.c.b16 %v461, %v459
    %v522 = vpack.c.b16 %v464, %v462
    %v523 = vpack.c.b16 %v465, %v463
    %v524 = vpack.c.b16 %v468, %v466
    %v525 = vpack.c.b16 %v469, %v467
    %v526 = vpack.c.b16 %v472, %v470
    %v527 = vpack.c.b16 %v473, %v471
    %v528 = vpack.c.b16 %v476, %v474
    %v529 = vpack.c.b16 %v477, %v475
    %v530 = vpack.c.b16 %v480, %v478
    %v531 = vpack.c.b16 %v481, %v479
    %v532 = vpack.c.b16 %v484, %v482
    %v533 = vpack.c.b16 %v485, %v483
    %v534 = vpack.c.b16 %v488, %v486
    %v535 = vpack.c.b16 %v489, %v487
    %v536 = vpack.c.b16 %v492, %v490
    %v537 = vpack.c.b16 %v493, %v491
    %v538 = vpack.c.b16 %v496, %v494
    %v539 = vpack.c.b16 %v497, %v495
    %v540 = vpack.c.b16 %v500, %v498
    %v541 = vpack.c.b16 %v501, %v499
    %v542 = vpack.c.b16 %v504, %v502
    %v543 = vpack.c.b16 %v505, %v503
    %v544 = vpack.c.b16 %v508, %v506
    %v545 = vpack.c.b16 %v509, %v507
    %v546 = vpack.c.b16 %v512, %v510
    %v547 = vpack.c.b16 %v513, %v511
    %v548 = vpack.c.b16 %v516, %v514
    %v549 = vpack.c.b16 %v517, %v515
    %582 = vmatprep.subr.bf16.mxu0 %v519
    %583 = vmatpush1.bf16.msra.mxu0 %v518
    %584 = vmatprep.subr.bf16.mxu0 %v521
    %585 = vmatpush1.bf16.msra.mxu0 %v520
    %586 = vmatprep.subr.bf16.mxu0 %v523
    %587 = vmatpush1.bf16.msra.mxu0 %v522
    %588 = vmatprep.subr.bf16.mxu0 %v525
    %589 = vmatpush1.bf16.msra.mxu0 %v524
    %590 = vmatprep.subr.bf16.mxu0 %v527
    %591 = vmatpush1.bf16.msra.mxu0 %v526
    %592 = vmatprep.subr.bf16.mxu0 %v529
    %593 = vmatpush1.bf16.msra.mxu0 %v528
    %594 = vmatprep.subr.bf16.mxu0 %v531
    %595 = vmatpush1.bf16.msra.mxu0 %v530
    %596 = vmatprep.subr.bf16.mxu0 %v533
    %597 = vmatpush1.bf16.msra.mxu0 %v532
    %598 = vmatprep.subr.bf16.mxu0 %v535
    %599 = vmatpush1.bf16.msra.mxu0 %v534
    %600 = vmatprep.subr.bf16.mxu0 %v537
    %601 = vmatpush1.bf16.msra.mxu0 %v536
    %602 = vmatprep.subr.bf16.mxu0 %v539
    %603 = vmatpush1.bf16.msra.mxu0 %v538
    %604 = vmatprep.subr.bf16.mxu0 %v541
    %605 = vmatpush1.bf16.msra.mxu0 %v540
    %606 = vmatprep.subr.bf16.mxu0 %v543
    %607 = vmatpush1.bf16.msra.mxu0 %v542
    %608 = vmatprep.subr.bf16.mxu0 %v545
    %609 = vmatpush1.bf16.msra.mxu0 %v544
    %610 = vmatprep.subr.bf16.mxu0 %v547
    %611 = vmatpush1.bf16.msra.mxu0 %v546
    %612 = vmatprep.subr.bf16.mxu0 %v549
    %613 = vmatpush1.bf16.msra.mxu0 %v548
    %614 = vmatprep.mubr.bf16.mxu0 %v374
    %615 = vmatmul.mubr.bf16.gmra.mrb[0].mxu0 %v373
    %v616 = vpop.f32.mrb[0].mxu0
    %v617 = vadd.f32 %v415, %v616
    %v618 = vpop.f32.mrb[0].mxu0
    %v619 = vadd.f32 %v419, %v618
    %v620 = vpop.f32.mrb[0].mxu0
    %v621 = vadd.f32 %v415, %v620
    %v622 = vpop.f32.mrb[0].mxu0
    %v623 = vadd.f32 %v419, %v622
    %624 = vmatprep.mubr.bf16.mxu0 %v376
    %625 = vmatmul.mubr.bf16.gmra.mrb[0].mxu0 %v375
    %v626 = vpop.f32.mrb[0].mxu0
    %v627 = vadd.f32 %v415, %v626
    %v628 = vpop.f32.mrb[0].mxu0
    %v629 = vadd.f32 %v419, %v628
    %v630 = vpop.f32.mrb[0].mxu0
    %v631 = vpop.f32.mrb[0].mxu0
    %632 = vdwg.mxu0
    %v633 = vpack.c.bf16 %v621, %v617
    %v634 = vpack.c.bf16 %v623, %v619
    %v635 = vpack.c.bf16 %v627, %v627
    %v636 = vpack.c.bf16 %v629, %v629
    %vm637 = vcmp.ge.bf16.partialorder %v633, 0
    %vm638 = vcmp.ge.bf16.partialorder %v634, 0
    %vm639 = vcmp.ge.bf16.partialorder %v635, 0
    %vm640 = vcmp.ge.bf16.partialorder %v636, 0
    %v641 = vmul.bf16 %v633, 1045249613
    %v642 = vmul.bf16 %v634, 1045249613
    %v643 = vmul.bf16 %v635, 1045249613
    %v644 = vmul.bf16 %v636, 1045249613
    %v645 = vsel %vm637, %v633, %v641
    %v646 = vsel %vm638, %v634, %v642
    %v647 = vsel %vm639, %v635, %v643
    %v648 = vsel %vm640, %v636, %v644
    %v649 = vmul.bf16 %v645, 1068842933
    %v650 = vmul.bf16 %v646, 1068842933
    %v651 = vmul.bf16 %v647, 1068842933
    %v652 = vmul.bf16 %v648, 1068842933
    %v653 = vld [vmem:[#allocation7 + $0x200] sm:$0xff]
    %v654 = vld [vmem:[#allocation7 + $0x208] sm:$0xff]
    %v655 = vld [vmem:[#allocation7 + $0x210] sm:$0xff]
    %v656 = vld [vmem:[#allocation7 + $0x218] sm:$0xff]
    %v657 = vld [vmem:[#allocation7 + $0x220] sm:$0xff]
    %v658 = vld [vmem:[#allocation7 + $0x228] sm:$0xff]
    %v659 = vld [vmem:[#allocation7 + $0x230] sm:$0xff]
    %v660 = vld [vmem:[#allocation7 + $0x238] sm:$0xff]
    %v661 = vld [vmem:[#allocation7 + $0x240] sm:$0xff]
    %v662 = vld [vmem:[#allocation7 + $0x248] sm:$0xff]
    %v663 = vld [vmem:[#allocation7 + $0x250] sm:$0xff]
    %v664 = vld [vmem:[#allocation7 + $0x258] sm:$0xff]
    %v665 = vld [vmem:[#allocation7 + $0x260] sm:$0xff]
    %v666 = vld [vmem:[#allocation7 + $0x268] sm:$0xff]
    %v667 = vld [vmem:[#allocation7 + $0x270] sm:$0xff]
    %v668 = vld [vmem:[#allocation7 + $0x278] sm:$0xff]
    %v669 = vld [vmem:[#allocation7 + $0x280] sm:$0xff]
    %v670 = vld [vmem:[#allocation7 + $0x288] sm:$0xff]
    %v671 = vld [vmem:[#allocation7 + $0x290] sm:$0xff]
    %v672 = vld [vmem:[#allocation7 + $0x298] sm:$0xff]
    %v673 = vld [vmem:[#allocation7 + $0x2a0] sm:$0xff]
    %v674 = vld [vmem:[#allocation7 + $0x2a8] sm:$0xff]
    %v675 = vld [vmem:[#allocation7 + $0x2b0] sm:$0xff]
    %v676 = vld [vmem:[#allocation7 + $0x2b8] sm:$0xff]
    %v677 = vld [vmem:[#allocation7 + $0x2c0] sm:$0xff]
    %v678 = vld [vmem:[#allocation7 + $0x2c8] sm:$0xff]
    %v679 = vld [vmem:[#allocation7 + $0x2d0] sm:$0xff]
    %v680 = vld [vmem:[#allocation7 + $0x2d8] sm:$0xff]
    %v681 = vld [vmem:[#allocation7 + $0x2e0] sm:$0xff]
    %v682 = vld [vmem:[#allocation7 + $0x2e8] sm:$0xff]
    %v683 = vld [vmem:[#allocation7 + $0x2f0] sm:$0xff]
    %v684 = vld [vmem:[#allocation7 + $0x2f8] sm:$0xff]
    %s685 = scalar_lea.vmem %s4, 2
    %v686 = vld [vmem:[%s685] ss:$4 sm:$0x3]
    %v688 = vlaneseq
    %v689 = vshrl.u32 %v688, 7
    %v690 = vsub.s32 0, %v689
    %v691 = vrot.slane %v686, %v690
    %v692 = vlaneseq
    %v693 = vshrl.u32 %v692, 7
    %v694 = vsub.s32 1, %v693
    %v695 = vrot.slane %v686, %v694
    %v730 = vunpack.c.l.b16 %v653
    %v731 = vunpack.c.h.b16 %v653
    %v732 = vunpack.c.l.b16 %v654
    %v733 = vunpack.c.h.b16 %v654
    %v734 = vunpack.c.l.b16 %v655
    %v735 = vunpack.c.h.b16 %v655
    %v736 = vunpack.c.l.b16 %v656
    %v737 = vunpack.c.h.b16 %v656
    %v738 = vunpack.c.l.b16 %v657
    %v739 = vunpack.c.h.b16 %v657
    %v740 = vunpack.c.l.b16 %v658
    %v741 = vunpack.c.h.b16 %v658
    %v742 = vunpack.c.l.b16 %v659
    %v743 = vunpack.c.h.b16 %v659
    %v744 = vunpack.c.l.b16 %v660
    %v745 = vunpack.c.h.b16 %v660
    %v746 = vunpack.c.l.b16 %v661
    %v747 = vunpack.c.h.b16 %v661
    %v748 = vunpack.c.l.b16 %v662
    %v749 = vunpack.c.h.b16 %v662
    %v750 = vunpack.c.l.b16 %v663
    %v751 = vunpack.c.h.b16 %v663
    %v752 = vunpack.c.l.b16 %v664
    %v753 = vunpack.c.h.b16 %v664
    %v754 = vunpack.c.l.b16 %v665
    %v755 = vunpack.c.h.b16 %v665
    %v756 = vunpack.c.l.b16 %v666
    %v757 = vunpack.c.h.b16 %v666
    %v758 = vunpack.c.l.b16 %v667
    %v759 = vunpack.c.h.b16 %v667
    %v760 = vunpack.c.l.b16 %v668
    %v761 = vunpack.c.h.b16 %v668
    %v762 = vunpack.c.l.b16 %v669
    %v763 = vunpack.c.h.b16 %v669
    %v764 = vunpack.c.l.b16 %v670
    %v765 = vunpack.c.h.b16 %v670
    %v766 = vunpack.c.l.b16 %v671
    %v767 = vunpack.c.h.b16 %v671
    %v768 = vunpack.c.l.b16 %v672
    %v769 = vunpack.c.h.b16 %v672
    %v770 = vunpack.c.l.b16 %v673
    %v771 = vunpack.c.h.b16 %v673
    %v772 = vunpack.c.l.b16 %v674
    %v773 = vunpack.c.h.b16 %v674
    %v774 = vunpack.c.l.b16 %v675
    %v775 = vunpack.c.h.b16 %v675
    %v776 = vunpack.c.l.b16 %v676
    %v777 = vunpack.c.h.b16 %v676
    %v778 = vunpack.c.l.b16 %v677
    %v779 = vunpack.c.h.b16 %v677
    %v780 = vunpack.c.l.b16 %v678
    %v781 = vunpack.c.h.b16 %v678
    %v782 = vunpack.c.l.b16 %v679
    %v783 = vunpack.c.h.b16 %v679
    %v784 = vunpack.c.l.b16 %v680
    %v785 = vunpack.c.h.b16 %v680
    %v786 = vunpack.c.l.b16 %v681
    %v787 = vunpack.c.h.b16 %v681
    %v788 = vunpack.c.l.b16 %v682
    %v789 = vunpack.c.h.b16 %v682
    %v790 = vunpack.c.l.b16 %v683
    %v791 = vunpack.c.h.b16 %v683
    %v792 = vunpack.c.l.b16 %v684
    %v793 = vunpack.c.h.b16 %v684
    %v794 = vpack.c.b16 %v732, %v730
    %v795 = vpack.c.b16 %v733, %v731
    %v796 = vpack.c.b16 %v736, %v734
    %v797 = vpack.c.b16 %v737, %v735
    %v798 = vpack.c.b16 %v740, %v738
    %v799 = vpack.c.b16 %v741, %v739
    %v800 = vpack.c.b16 %v744, %v742
    %v801 = vpack.c.b16 %v745, %v743
    %v802 = vpack.c.b16 %v748, %v746
    %v803 = vpack.c.b16 %v749, %v747
    %v804 = vpack.c.b16 %v752, %v750
    %v805 = vpack.c.b16 %v753, %v751
    %v806 = vpack.c.b16 %v756, %v754
    %v807 = vpack.c.b16 %v757, %v755
    %v808 = vpack.c.b16 %v760, %v758
    %v809 = vpack.c.b16 %v761, %v759
    %v810 = vpack.c.b16 %v764, %v762
    %v811 = vpack.c.b16 %v765, %v763
    %v812 = vpack.c.b16 %v768, %v766
    %v813 = vpack.c.b16 %v769, %v767
    %v814 = vpack.c.b16 %v772, %v770
    %v815 = vpack.c.b16 %v773, %v771
    %v816 = vpack.c.b16 %v776, %v774
    %v817 = vpack.c.b16 %v777, %v775
    %v818 = vpack.c.b16 %v780, %v778
    %v819 = vpack.c.b16 %v781, %v779
    %v820 = vpack.c.b16 %v784, %v782
    %v821 = vpack.c.b16 %v785, %v783
    %v822 = vpack.c.b16 %v788, %v786
    %v823 = vpack.c.b16 %v789, %v787
    %v824 = vpack.c.b16 %v792, %v790
    %v825 = vpack.c.b16 %v793, %v791
    %858 = vmatprep.subr.bf16.mxu0 %v795
    %859 = vmatpush1.bf16.msra.mxu0 %v794
    %860 = vmatprep.subr.bf16.mxu0 %v797
    %861 = vmatpush1.bf16.msra.mxu0 %v796
    %862 = vmatprep.subr.bf16.mxu0 %v799
    %863 = vmatpush1.bf16.msra.mxu0 %v798
    %864 = vmatprep.subr.bf16.mxu0 %v801
    %865 = vmatpush1.bf16.msra.mxu0 %v800
    %866 = vmatprep.subr.bf16.mxu0 %v803
    %867 = vmatpush1.bf16.msra.mxu0 %v802
    %868 = vmatprep.subr.bf16.mxu0 %v805
    %869 = vmatpush1.bf16.msra.mxu0 %v804
    %870 = vmatprep.subr.bf16.mxu0 %v807
    %871 = vmatpush1.bf16.msra.mxu0 %v806
    %872 = vmatprep.subr.bf16.mxu0 %v809
    %873 = vmatpush1.bf16.msra.mxu0 %v808
    %874 = vmatprep.subr.bf16.mxu0 %v811
    %875 = vmatpush1.bf16.msra.mxu0 %v810
    %876 = vmatprep.subr.bf16.mxu0 %v813
    %877 = vmatpush1.bf16.msra.mxu0 %v812
    %878 = vmatprep.subr.bf16.mxu0 %v815
    %879 = vmatpush1.bf16.msra.mxu0 %v814
    %880 = vmatprep.subr.bf16.mxu0 %v817
    %881 = vmatpush1.bf16.msra.mxu0 %v816
    %882 = vmatprep.subr.bf16.mxu0 %v819
    %883 = vmatpush1.bf16.msra.mxu0 %v818
    %884 = vmatprep.subr.bf16.mxu0 %v821
    %885 = vmatpush1.bf16.msra.mxu0 %v820
    %886 = vmatprep.subr.bf16.mxu0 %v823
    %887 = vmatpush1.bf16.msra.mxu0 %v822
    %888 = vmatprep.subr.bf16.mxu0 %v825
    %889 = vmatpush1.bf16.msra.mxu0 %v824
    %890 = vmatprep.mubr.bf16.mxu0 %v650
    %891 = vmatmul.mubr.bf16.gmra.mrb[0].mxu0 %v649
    %v892 = vpop.f32.mrb[0].mxu0
    %v893 = vadd.f32 %v691, %v892
    %v894 = vpop.f32.mrb[0].mxu0
    %v895 = vadd.f32 %v695, %v894
    %v896 = vpop.f32.mrb[0].mxu0
    %v897 = vadd.f32 %v691, %v896
    %v898 = vpop.f32.mrb[0].mxu0
    %v899 = vadd.f32 %v695, %v898
    %900 = vmatprep.mubr.bf16.mxu0 %v652
    %901 = vmatmul.mubr.bf16.gmra.mrb[0].mxu0 %v651
    %v902 = vpop.f32.mrb[0].mxu0
    %v903 = vadd.f32 %v691, %v902
    %v904 = vpop.f32.mrb[0].mxu0
    %v905 = vadd.f32 %v695, %v904
    %v906 = vpop.f32.mrb[0].mxu0
    %v907 = vpop.f32.mrb[0].mxu0
    %908 = vdwg.mxu0
    %v909 = vpack.c.bf16 %v897, %v893
    %v910 = vpack.c.bf16 %v899, %v895
    %v911 = vpack.c.bf16 %v903, %v903
    %v912 = vpack.c.bf16 %v905, %v905
    %vm913 = vcmp.ge.bf16.partialorder %v909, 0
    %vm914 = vcmp.ge.bf16.partialorder %v910, 0
    %vm915 = vcmp.ge.bf16.partialorder %v911, 0
    %vm916 = vcmp.ge.bf16.partialorder %v912, 0
    %v917 = vmul.bf16 %v909, 1045249613
    %v918 = vmul.bf16 %v910, 1045249613
    %v919 = vmul.bf16 %v911, 1045249613
    %v920 = vmul.bf16 %v912, 1045249613
    %v921 = vsel %vm913, %v909, %v917
    %v922 = vsel %vm914, %v910, %v918
    %v923 = vsel %vm915, %v911, %v919
    %v924 = vsel %vm916, %v912, %v920
    %v925 = vmul.bf16 %v921, 1068842933
    %v926 = vmul.bf16 %v922, 1068842933
    %v927 = vmul.bf16 %v923, 1068842933
    %v928 = vmul.bf16 %v924, 1068842933
    %v929 = vld [vmem:[#allocation8] sm:$0xf]
    %v930 = vld [vmem:[#allocation8 + $0x4] sm:$0xf]
    %v931 = vld [vmem:[#allocation8 + $0x8] sm:$0xf]
    %v932 = vld [vmem:[#allocation8 + $0xc] sm:$0xf]
    %v933 = vld [vmem:[#allocation8 + $0x10] sm:$0xf]
    %v934 = vld [vmem:[#allocation8 + $0x14] sm:$0xf]
    %v935 = vld [vmem:[#allocation8 + $0x18] sm:$0xf]
    %v936 = vld [vmem:[#allocation8 + $0x1c] sm:$0xf]
    %v937 = vld [vmem:[#allocation8 + $0x20] sm:$0xf]
    %v938 = vld [vmem:[#allocation8 + $0x24] sm:$0xf]
    %v939 = vld [vmem:[#allocation8 + $0x28] sm:$0xf]
    %v940 = vld [vmem:[#allocation8 + $0x2c] sm:$0xf]
    %v941 = vld [vmem:[#allocation8 + $0x30] sm:$0xf]
    %v942 = vld [vmem:[#allocation8 + $0x34] sm:$0xf]
    %v943 = vld [vmem:[#allocation8 + $0x38] sm:$0xf]
    %v944 = vld [vmem:[#allocation8 + $0x3c] sm:$0xf]
    %v945 = vld [vmem:[#allocation8 + $0x40] sm:$0xf]
    %v946 = vld [vmem:[#allocation8 + $0x44] sm:$0xf]
    %v947 = vld [vmem:[#allocation8 + $0x48] sm:$0xf]
    %v948 = vld [vmem:[#allocation8 + $0x4c] sm:$0xf]
    %v949 = vld [vmem:[#allocation8 + $0x50] sm:$0xf]
    %v950 = vld [vmem:[#allocation8 + $0x54] sm:$0xf]
    %v951 = vld [vmem:[#allocation8 + $0x58] sm:$0xf]
    %v952 = vld [vmem:[#allocation8 + $0x5c] sm:$0xf]
    %v953 = vld [vmem:[#allocation8 + $0x60] sm:$0xf]
    %v954 = vld [vmem:[#allocation8 + $0x64] sm:$0xf]
    %v955 = vld [vmem:[#allocation8 + $0x68] sm:$0xf]
    %v956 = vld [vmem:[#allocation8 + $0x6c] sm:$0xf]
    %v957 = vld [vmem:[#allocation8 + $0x70] sm:$0xf]
    %v958 = vld [vmem:[#allocation8 + $0x74] sm:$0xf]
    %v959 = vld [vmem:[#allocation8 + $0x78] sm:$0xf]
    %v960 = vld [vmem:[#allocation8 + $0x7c] sm:$0xf]
    %v961 = vld [vmem:[%s5] sm:$0x1]
    %v962 = vlaneseq
    %v963 = vshrl.u32 %v962, 7
    %v964 = vsub.s32 0, %v963
    %v965 = vrot.slane %v961, %v964
    %v998 = vunpack.c.l.b16 %v929
    %v999 = vunpack.c.l.b16 %v930
    %v1000 = vunpack.c.l.b16 %v931
    %v1001 = vunpack.c.l.b16 %v932
    %v1002 = vunpack.c.l.b16 %v933
    %v1003 = vunpack.c.l.b16 %v934
    %v1004 = vunpack.c.l.b16 %v935
    %v1005 = vunpack.c.l.b16 %v936
    %v1006 = vunpack.c.l.b16 %v937
    %v1007 = vunpack.c.l.b16 %v938
    %v1008 = vunpack.c.l.b16 %v939
    %v1009 = vunpack.c.l.b16 %v940
    %v1010 = vunpack.c.l.b16 %v941
    %v1011 = vunpack.c.l.b16 %v942
    %v1012 = vunpack.c.l.b16 %v943
    %v1013 = vunpack.c.l.b16 %v944
    %v1014 = vunpack.c.l.b16 %v945
    %v1015 = vunpack.c.l.b16 %v946
    %v1016 = vunpack.c.l.b16 %v947
    %v1017 = vunpack.c.l.b16 %v948
    %v1018 = vunpack.c.l.b16 %v949
    %v1019 = vunpack.c.l.b16 %v950
    %v1020 = vunpack.c.l.b16 %v951
    %v1021 = vunpack.c.l.b16 %v952
    %v1022 = vunpack.c.l.b16 %v953
    %v1023 = vunpack.c.l.b16 %v954
    %v1024 = vunpack.c.l.b16 %v955
    %v1025 = vunpack.c.l.b16 %v956
    %v1026 = vunpack.c.l.b16 %v957
    %v1027 = vunpack.c.l.b16 %v958
    %v1028 = vunpack.c.l.b16 %v959
    %v1029 = vunpack.c.l.b16 %v960
    %v1030 = vpack.c.b16 %v999, %v998
    %v1031 = vpack.c.b16 %v1001, %v1000
    %v1032 = vpack.c.b16 %v1003, %v1002
    %v1033 = vpack.c.b16 %v1005, %v1004
    %v1034 = vpack.c.b16 %v1007, %v1006
    %v1035 = vpack.c.b16 %v1009, %v1008
    %v1036 = vpack.c.b16 %v1011, %v1010
    %v1037 = vpack.c.b16 %v1013, %v1012
    %v1038 = vpack.c.b16 %v1015, %v1014
    %v1039 = vpack.c.b16 %v1017, %v1016
    %v1040 = vpack.c.b16 %v1019, %v1018
    %v1041 = vpack.c.b16 %v1021, %v1020
    %v1042 = vpack.c.b16 %v1023, %v1022
    %v1043 = vpack.c.b16 %v1025, %v1024
    %v1044 = vpack.c.b16 %v1027, %v1026
    %v1045 = vpack.c.b16 %v1029, %v1028
    %1062 = vmatprep.subr.bf16.mxu0 0
    %1063 = vmatpush1.bf16.msra.mxu0 %v1030
    %1064 = vmatprep.subr.bf16.mxu0 0
    %1065 = vmatpush1.bf16.msra.mxu0 %v1031
    %1066 = vmatprep.subr.bf16.mxu0 0
    %1067 = vmatpush1.bf16.msra.mxu0 %v1032
    %1068 = vmatprep.subr.bf16.mxu0 0
    %1069 = vmatpush1.bf16.msra.mxu0 %v1033
    %1070 = vmatprep.subr.bf16.mxu0 0
    %1071 = vmatpush1.bf16.msra.mxu0 %v1034
    %1072 = vmatprep.subr.bf16.mxu0 0
    %1073 = vmatpush1.bf16.msra.mxu0 %v1035
    %1074 = vmatprep.subr.bf16.mxu0 0
    %1075 = vmatpush1.bf16.msra.mxu0 %v1036
    %1076 = vmatprep.subr.bf16.mxu0 0
    %1077 = vmatpush1.bf16.msra.mxu0 %v1037
    %1078 = vmatprep.subr.bf16.mxu0 0
    %1079 = vmatpush1.bf16.msra.mxu0 %v1038
    %1080 = vmatprep.subr.bf16.mxu0 0
    %1081 = vmatpush1.bf16.msra.mxu0 %v1039
    %1082 = vmatprep.subr.bf16.mxu0 0
    %1083 = vmatpush1.bf16.msra.mxu0 %v1040
    %1084 = vmatprep.subr.bf16.mxu0 0
    %1085 = vmatpush1.bf16.msra.mxu0 %v1041
    %1086 = vmatprep.subr.bf16.mxu0 0
    %1087 = vmatpush1.bf16.msra.mxu0 %v1042
    %1088 = vmatprep.subr.bf16.mxu0 0
    %1089 = vmatpush1.bf16.msra.mxu0 %v1043
    %1090 = vmatprep.subr.bf16.mxu0 0
    %1091 = vmatpush1.bf16.msra.mxu0 %v1044
    %1092 = vmatprep.subr.bf16.mxu0 0
    %1093 = vmatpush1.bf16.msra.mxu0 %v1045
    %1094 = vmatprep.mubr.bf16.mxu0 %v926
    %1095 = vmatmul.mubr.bf16.gmra.mrb[0].mxu0 %v925
    %v1096 = vpop.f32.mrb[0].mxu0
    %v1097 = vadd.f32 %v965, %v1096
    %v1098 = vpop.f32.mrb[0].mxu0
    %v1099 = vpop.f32.mrb[0].mxu0
    %v1100 = vadd.f32 %v965, %v1099
    %v1101 = vpop.f32.mrb[0].mxu0
    %1102 = vmatprep.mubr.bf16.mxu0 %v928
    %1103 = vmatmul.mubr.bf16.gmra.mrb[0].mxu0 %v927
    %v1104 = vpop.f32.mrb[0].mxu0
    %v1105 = vadd.f32 %v965, %v1104
    %v1106 = vpop.f32.mrb[0].mxu0
    %v1107 = vpop.f32.mrb[0].mxu0
    %v1108 = vpop.f32.mrb[0].mxu0
    %1109 = vdwg.mxu0
    %v1110 = vpack.c.bf16 %v1100, %v1097
    %v1111 = vpack.c.bf16 %v1105, %v1105
    %vm1112 = vcmp.ge.bf16.partialorder %v1110, 0
    %vm1113 = vcmp.ge.bf16.partialorder %v1111, 0
    %v1114 = vmul.bf16 %v1110, 1045249613
    %v1115 = vmul.bf16 %v1111, 1045249613
    %v1116 = vsel %vm1112, %v1110, %v1114
    %v1117 = vsel %vm1113, %v1111, %v1115
    %v1118 = vmul.bf16 %v1116, 1068842933
    %v1119 = vmul.bf16 %v1117, 1068842933
    %v1120 = vld [vmem:[#allocation8 + $0x80] sm:$0xf]
    %v1121 = vld [vmem:[#allocation8 + $0x84] sm:$0xf]
    %v1122 = vld [vmem:[#allocation8 + $0x88] sm:$0xf]
    %v1123 = vld [vmem:[#allocation8 + $0x8c] sm:$0xf]
    %v1124 = vld [vmem:[#allocation8 + $0x90] sm:$0xf]
    %v1125 = vld [vmem:[#allocation8 + $0x94] sm:$0xf]
    %v1126 = vld [vmem:[#allocation8 + $0x98] sm:$0xf]
    %v1127 = vld [vmem:[#allocation8 + $0x9c] sm:$0xf]
    %v1128 = vld [vmem:[#allocation8 + $0xa0] sm:$0xf]
    %v1129 = vld [vmem:[#allocation8 + $0xa4] sm:$0xf]
    %v1130 = vld [vmem:[#allocation8 + $0xa8] sm:$0xf]
    %v1131 = vld [vmem:[#allocation8 + $0xac] sm:$0xf]
    %v1132 = vld [vmem:[#allocation8 + $0xb0] sm:$0xf]
    %v1133 = vld [vmem:[#allocation8 + $0xb4] sm:$0xf]
    %v1134 = vld [vmem:[#allocation8 + $0xb8] sm:$0xf]
    %v1135 = vld [vmem:[#allocation8 + $0xbc] sm:$0xf]
    %v1136 = vld [vmem:[%s5 + $0x1] sm:$0x1]
    %v1137 = vlaneseq
    %v1138 = vshrl.u32 %v1137, 7
    %v1139 = vsub.s32 0, %v1138
    %v1140 = vrot.slane %v1136, %v1139
    %v1157 = vunpack.c.l.b16 %v1120
    %v1158 = vunpack.c.l.b16 %v1121
    %v1159 = vunpack.c.l.b16 %v1122
    %v1160 = vunpack.c.l.b16 %v1123
    %v1161 = vunpack.c.l.b16 %v1124
    %v1162 = vunpack.c.l.b16 %v1125
    %v1163 = vunpack.c.l.b16 %v1126
    %v1164 = vunpack.c.l.b16 %v1127
    %v1165 = vunpack.c.l.b16 %v1128
    %v1166 = vunpack.c.l.b16 %v1129
    %v1167 = vunpack.c.l.b16 %v1130
    %v1168 = vunpack.c.l.b16 %v1131
    %v1169 = vunpack.c.l.b16 %v1132
    %v1170 = vunpack.c.l.b16 %v1133
    %v1171 = vunpack.c.l.b16 %v1134
    %v1172 = vunpack.c.l.b16 %v1135
    %v1173 = vpack.c.b16 %v1158, %v1157
    %v1174 = vpack.c.b16 %v1160, %v1159
    %v1175 = vpack.c.b16 %v1162, %v1161
    %v1176 = vpack.c.b16 %v1164, %v1163
    %v1177 = vpack.c.b16 %v1166, %v1165
    %v1178 = vpack.c.b16 %v1168, %v1167
    %v1179 = vpack.c.b16 %v1170, %v1169
    %v1180 = vpack.c.b16 %v1172, %v1171
    %1189 = vmatprep.subr.bf16.mxu0 0
    %1190 = vmatpush1.bf16.msra.mxu0 %v1173
    %1191 = vmatprep.subr.bf16.mxu0 0
    %1192 = vmatpush1.bf16.msra.mxu0 %v1174
    %1193 = vmatprep.subr.bf16.mxu0 0
    %1194 = vmatpush1.bf16.msra.mxu0 %v1175
    %1195 = vmatprep.subr.bf16.mxu0 0
    %1196 = vmatpush1.bf16.msra.mxu0 %v1176
    %1197 = vmatprep.subr.bf16.mxu0 0
    %1198 = vmatpush1.bf16.msra.mxu0 %v1177
    %1199 = vmatprep.subr.bf16.mxu0 0
    %1200 = vmatpush1.bf16.msra.mxu0 %v1178
    %1201 = vmatprep.subr.bf16.mxu0 0
    %1202 = vmatpush1.bf16.msra.mxu0 %v1179
    %1203 = vmatprep.subr.bf16.mxu0 0
    %1204 = vmatpush1.bf16.msra.mxu0 %v1180
    %1205 = vmatprep.subr.bf16.mxu0 0
    %1206 = vmatpush1.bf16.msra.mxu0 0
    %1207 = vmatprep.subr.bf16.mxu0 0
    %1208 = vmatpush1.bf16.msra.mxu0 0
    %1209 = vmatprep.subr.bf16.mxu0 0
    %1210 = vmatpush1.bf16.msra.mxu0 0
    %1211 = vmatprep.subr.bf16.mxu0 0
    %1212 = vmatpush1.bf16.msra.mxu0 0
    %1213 = vmatprep.subr.bf16.mxu0 0
    %1214 = vmatpush1.bf16.msra.mxu0 0
    %1215 = vmatprep.subr.bf16.mxu0 0
    %1216 = vmatpush1.bf16.msra.mxu0 0
    %1217 = vmatprep.subr.bf16.mxu0 0
    %1218 = vmatpush1.bf16.msra.mxu0 0
    %1219 = vmatprep.subr.bf16.mxu0 0
    %1220 = vmatpush1.bf16.msra.mxu0 0
    %1221 = vmatprep.mubr.bf16.mxu0 0
    %1222 = vmatmul.mubr.bf16.gmra.mrb[0].mxu0 %v1118
    %v1223 = vpop.f32.mrb[0].mxu0
    %v1224 = vadd.f32 %v1140, %v1223
    %v1225 = vpop.f32.mrb[0].mxu0
    %v1226 = vpop.f32.mrb[0].mxu0
    %v1227 = vadd.f32 %v1140, %v1226
    %v1228 = vpop.f32.mrb[0].mxu0
    %1229 = vmatprep.mubr.bf16.mxu0 0
    %1230 = vmatmul.mubr.bf16.gmra.mrb[0].mxu0 %v1119
    %v1231 = vpop.f32.mrb[0].mxu0
    %v1232 = vadd.f32 %v1140, %v1231
    %v1233 = vpop.f32.mrb[0].mxu0
    %v1234 = vpop.f32.mrb[0].mxu0
    %v1235 = vpop.f32.mrb[0].mxu0
    %1236 = vdwg.mxu0
    %vm1237 = vcmp.ge.f32.partialorder %v1224, 0.0
    %vm1238 = vcmp.ge.f32.partialorder %v1227, 0.0
    %vm1239 = vcmp.ge.f32.partialorder %v1232, 0.0
    %v1240 = vmul.f32 %v1224, 0.2
    %v1241 = vmul.f32 %v1227, 0.2
    %v1242 = vmul.f32 %v1232, 0.2
    %v1243 = vsel %vm1237, %v1224, %v1240
    %v1244 = vsel %vm1238, %v1227, %v1241
    %v1245 = vsel %vm1239, %v1232, %v1242
    %v1246 = vmul.f32 %v1243, 1.4142135
    %v1247 = vmul.f32 %v1244, 1.4142135
    %v1248 = vmul.f32 %v1245, 1.4142135
    %v1249 = vxor.u32 %v1246, 2147483648
    %v1250 = vxor.u32 %v1247, 2147483648
    %v1251 = vxor.u32 %v1248, 2147483648
    %v1252 = vmul.f32 %v1249, 1.442695
    %v1253 = vpow.pop %v1252
    %v1254 = vmul.f32 %v1250, 1.442695
    %v1255 = vpow.pop %v1254
    %v1256 = vmul.f32 %v1251, 1.442695
    %v1257 = vpow.pop %v1256
    %v1258 = vadd.f32 %v1253, 1.0
    %v1259 = vadd.f32 %v1255, 1.0
    %v1260 = vadd.f32 %v1257, 1.0
    %v1261 = vrcp.pop %v1258
    %v1262 = vmul.f32 1.0, %v1261
    %v1263 = vrcp.pop %v1259
    %v1264 = vmul.f32 1.0, %v1263
    %v1265 = vrcp.pop %v1260
    %v1266 = vmul.f32 1.0, %v1265
    %v1267 = vld [vmem:[#allocation2] sm:$0xff]
    %v1268 = vld [vmem:[#allocation2 + $0x10] sm:$0xff]
    %v1269 = vld [vmem:[#allocation2 + $0x20] sm:$0xff]
    %v1270 = vld [vmem:[#allocation2 + $0x8] sm:$0xff]
    %v1271 = vld [vmem:[#allocation2 + $0x18] sm:$0xff]
    %v1272 = vld [vmem:[#allocation2 + $0x28] sm:$0xff]
    %v1273 = vsub.f32 %v1270, %v1267
    %v1274 = vsub.f32 %v1271, %v1268
    %v1275 = vsub.f32 %v1272, %v1269
    %v1276 = vmul.f32 %v1262, %v1273
    %v1277 = vmul.f32 %v1264, %v1274
    %v1278 = vmul.f32 %v1266, %v1275
    %v1279 = vadd.f32 %v1267, %v1276
    %v1280 = vadd.f32 %v1268, %v1277
    %v1281 = vadd.f32 %v1269, %v1278
    %1282 = vst [vmem:[#allocation10] sm:$0xff] %v1279
    %1283 = vst [vmem:[#allocation10 + $0x8] sm:$0xff] %v1280
    %1284 = vst [vmem:[#allocation10 + $0x10] sm:$0xff] %v1281
    // Predicated region
    $region42: #{tpu_custom_call.1} parent=1 // pred_check
      _
    $region43: #{tpu_custom_call.1} parent=1 // pred_check_branch
      %1286 = sbr.rel (0) target = $region45
    $region44: #{tpu_custom_call.1} parent=1 // pred_region
      %s1288 = ssub.s32 384, 384
      %1289 = vsyncadd [#allocation4], %s1288
      %s1290 = sshll.u32 [#allocation10], 4
      %s1291 = int_to_ptr.vmem [resolvable:$true] %s1290
      %1296 = dma.vmem_to_hbm [thread:$0]  %s1291, 384, %s6, [#allocation4], 128, 128, 8
    $region45: #{tpu_custom_call.1} parent=1 // pred_fallthru
      _
    // Predicated region
    $region46: #{tpu_custom_call.1} parent=1 // pred_check
      _
    $region47: #{tpu_custom_call.1} parent=1 // pred_check_branch
      %1298 = sbr.rel (0) target = $region49
    $region48: #{tpu_custom_call.1} parent=1 // pred_region
      %1299 = dma.done [#allocation4], 384
    $region49: #{tpu_custom_call.1} parent=1 // pred_fallthru
      _
    %1300 = vsyncpa [#allocation3], 1
    %1301 = vsyncpa [#allocation6], 1
    %1302 = vsyncpa [#allocation9], 1
    %1303 = vsyncpa [#allocation4], 1

</llo_original>
